<compile_context>
chip_gen: v7x
topology: tpu7x:2x2x1
jax: 0.10.0
libtpu: 0.0.40
codegen_flags: <defaults>
</compile_context>

<pallas_src>
import math

import jax
import jax.numpy as jnp
from jax.experimental import pallas as pl
from jax.experimental.pallas import tpu as pltpu


def _round_up(x: int, m: int) -> int:
    return ((x + m - 1) // m) * m


def _vmem_bytes(shape, dtype) -> int:
    """Approximate VMEM footprint of a block, including (sublane, lane) padding."""
    itemsize = jnp.dtype(dtype).itemsize
    dims = list(shape)
    dims[-1] = _round_up(dims[-1], 128)
    if len(dims) >= 2:
        sub = 16 if itemsize == 2 else (32 if itemsize == 1 else 8)
        dims[-2] = _round_up(dims[-2], sub)
    return math.prod(dims) * itemsize


# ----------------------------------------------------------------------------
# Kernels
# ----------------------------------------------------------------------------
def _make_train_kernel_resident(scale: float, margin: float, tile_n: int, mxu_dtype):
    """grid = (C_tiles,): embeddings / labels resident, weight streams over j."""
    scaled_margin = scale * margin

    def kernel(emb_ref, w_ref, labels_ref, out_ref):
        j = pl.program_id(0)  # class tile

        # Weight-column normalization (changes every step; f32 math on bf16 block).
        w = w_ref[...].astype(jnp.float32)                       # (D, tn)
        col_sq = jnp.sum(w * w, axis=0, keepdims=True)           # (1, tn)
        w_n = (w * jax.lax.rsqrt(col_sq + 1e-16)).astype(mxu_dtype)

        # Embedding row normalization with `scale` folded in.  (B, D) work is a
        # ~1/tn fraction of the matmul, so recomputing it per C tile keeps the C
        # axis fully "parallel" (megacore-shardable on v7x) with no scratch deps.
        emb = emb_ref[...].astype(jnp.float32)                   # (B, D)
        row_sq = jnp.sum(emb * emb, axis=1, keepdims=True)       # (B, 1)
        emb_n = (emb * (scale * jax.lax.rsqrt(row_sq + 1e-16))).astype(mxu_dtype)

        # s_cos = scale * cos_theta   (MXU, f32 accumulation)
        s_cos = jnp.dot(emb_n, w_n, preferred_element_type=jnp.float32)

        # one-hot: grid-invariant local lane iota vs (labels - j*tn).
        local_ids = jax.lax.broadcasted_iota(jnp.int32, s_cos.shape, 1)
        onehot = local_ids == (labels_ref[...] - j * tile_n)
        out_ref[...] = jnp.where(onehot, s_cos - scaled_margin, s_cos).astype(out_ref.dtype)

    return kernel


def _make_train_kernel_tiled(scale: float, margin: float, tile_n: int, mxu_dtype):
    """grid = (C_tiles, B_tiles), C outer: weight norm hoisted into a VMEM scratch."""
    scaled_margin = scale * margin

    def kernel(emb_ref, w_ref, labels_ref, out_ref, w_n_ref):
        j = pl.program_id(0)  # C tile (outer; weight block resident across i)
        i = pl.program_id(1)  # B tile (inner)

        @pl.when(i == 0)
        def _():
            w = w_ref[...].astype(jnp.float32)                    # (D, tn)
            col_sq = jnp.sum(w * w, axis=0, keepdims=True)
            w_n_ref[...] = (w * jax.lax.rsqrt(col_sq + 1e-16)).astype(w_n_ref.dtype)

        emb = emb_ref[...].astype(jnp.float32)                    # (tm, D)
        row_sq = jnp.sum(emb * emb, axis=1, keepdims=True)        # (tm, 1)
        emb_n = (emb * (scale * jax.lax.rsqrt(row_sq + 1e-16))).astype(mxu_dtype)

        s_cos = jnp.dot(emb_n, w_n_ref[...], preferred_element_type=jnp.float32)

        local_ids = jax.lax.broadcasted_iota(jnp.int32, s_cos.shape, 1)
        onehot = local_ids == (labels_ref[...] - j * tile_n)
        out_ref[...] = jnp.where(onehot, s_cos - scaled_margin, s_cos).astype(out_ref.dtype)

    return kernel


def _eval_kernel(emb_ref, w_ref, out_ref):
    # Operands arrive already in the MXU dtype from HBM; no per-step casts.
    out_ref[...] = jnp.dot(emb_ref[...], w_ref[...],
                           preferred_element_type=jnp.float32).astype(out_ref.dtype)


# ----------------------------------------------------------------------------
# Wrapper
# ----------------------------------------------------------------------------
def additive_softmax_linear(embeddings, weight, labels=None, *, scale=30.0,
                            margin=0.35, training=True,
                            tile_m=256, tile_n=2048, mxu_bf16=True,
                            max_resident_b=2048,
                            vmem_budget_bytes=28 * 1024 * 1024):
    """Forward pass of AdditiveSoftmaxLinear.

    embeddings: (B, D) float32
    weight:     (D, C) float32
    labels:     (B,) int32 (required iff training=True)
    returns:    (B, C) float32 logits
    """
    B, D = embeddings.shape
    D2, C = weight.shape
    assert D == D2
    if training:
        assert labels is not None
    else:
        assert labels is None

    mxu_dtype = jnp.bfloat16 if mxu_bf16 else jnp.float32
    sub = 16 if mxu_bf16 else 8
    itemsize = jnp.dtype(mxu_dtype).itemsize

    # ---- B tiling ------------------------------------------------------------
    resident = B <= max_resident_b
    if resident:
        tm = _round_up(B, sub)          # whole (padded) batch is one resident block
        B_pad = tm
    else:
        tm = _round_up(min(tile_m, _round_up(B, sub)), sub)
        B_pad = _round_up(B, tm)

    # ---- C tiling: shrink tn until the double-buffered working set fits -------
    def working_set(tn_):
        ws = 2 * _vmem_bytes((tm, D), mxu_dtype)            # embeddings block
        ws += 2 * _vmem_bytes((D, tn_), mxu_dtype)          # weight block
        ws += 2 * _vmem_bytes((tm, tn_), jnp.float32)       # output block
        if training:
            ws += 2 * _vmem_bytes((tm, 1), jnp.int32)       # labels block
            if not resident:
                ws += _vmem_bytes((D, tn_), mxu_dtype)      # normalized-weight scratch
        return ws

    tn = min(_round_up(tile_n, 128), _round_up(C, 128))
    while tn > 128 and working_set(tn) > vmem_budget_bytes:
        tn = _round_up(tn // 2, 128)
    C_pad = _round_up(C, tn)
    c_tiles = C_pad // tn
    b_tiles = B_pad // tm
    # Note (v7x): for megacore balance prefer c_tiles >= 2 (and even) when C allows.

    # ---- operands: cast to the MXU dtype already in HBM (halves weight DMA) ---
    emb_p = embeddings.astype(mxu_dtype)
    if B_pad != B:
        emb_p = jnp.pad(emb_p, ((0, B_pad - B), (0, 0)))
    w_p = weight.astype(mxu_dtype)
    if C_pad != C:
        w_p = jnp.pad(w_p, ((0, 0), (0, C_pad - C)))

    out_shape = jax.ShapeDtypeStruct((B_pad, C_pad), jnp.float32)

    emb_reads = 1 if resident else c_tiles
    cost = pl.CostEstimate(
        flops=2 * B_pad * D * C_pad,
        transcendentals=(c_tiles * B_pad + C_pad) if training else 0,
        bytes_accessed=(emb_reads * B_pad * D + D * C_pad) * itemsize
        + B_pad * C_pad * 4
        + (emb_reads * B_pad * 4 if training else 0),
    )
    vmem_limit = int(min(max(working_set(tn) + (4 << 20), 16 << 20), 64 << 20))

    if training:
        labels_p = jnp.pad(labels.astype(jnp.int32), (0, B_pad - B),
                           constant_values=-1).reshape(B_pad, 1)
        if resident:
            grid_spec = pltpu.PrefetchScalarGridSpec(
                num_scalar_prefetch=0, grid=(c_tiles,),
                in_specs=[
                    pl.BlockSpec((B_pad, D), lambda j: (0, 0)),   # embeddings (resident)
                    pl.BlockSpec((D, tn), lambda j: (0, j)),      # weight (streams)
                    pl.BlockSpec((B_pad, 1), lambda j: (0, 0)),   # labels (resident)
                ],
                out_specs=pl.BlockSpec((B_pad, tn), lambda j: (0, j)),
            )
            kernel = _make_train_kernel_resident(float(scale), float(margin), tn, mxu_dtype)
            semantics = ("parallel",)
        else:
            grid_spec = pltpu.PrefetchScalarGridSpec(
                num_scalar_prefetch=0, grid=(c_tiles, b_tiles),
                in_specs=[
                    pl.BlockSpec((tm, D), lambda j, i: (i, 0)),   # embeddings
                    pl.BlockSpec((D, tn), lambda j, i: (0, j)),   # weight (resident over i)
                    pl.BlockSpec((tm, 1), lambda j, i: (i, 0)),   # labels
                ],
                out_specs=pl.BlockSpec((tm, tn), lambda j, i: (i, j)),
                scratch_shapes=[pltpu.VMEM((D, tn), mxu_dtype)],  # normalized weight tile
            )
            kernel = _make_train_kernel_tiled(float(scale), float(margin), tn, mxu_dtype)
            semantics = ("parallel", "arbitrary")   # scratch reused across inner B axis
        out = pl.pallas_call(
            kernel,
            out_shape=out_shape,
            grid_spec=grid_spec,
            compiler_params=pltpu.CompilerParams(
                dimension_semantics=semantics, vmem_limit_bytes=vmem_limit),
            cost_estimate=cost,
        )(emb_p, w_p, labels_p)
    else:
        if resident:
            grid_spec = pltpu.PrefetchScalarGridSpec(
                num_scalar_prefetch=0, grid=(c_tiles,),
                in_specs=[
                    pl.BlockSpec((B_pad, D), lambda j: (0, 0)),
                    pl.BlockSpec((D, tn), lambda j: (0, j)),
                ],
                out_specs=pl.BlockSpec((B_pad, tn), lambda j: (0, j)),
            )
            semantics = ("parallel",)
        else:
            grid_spec = pltpu.PrefetchScalarGridSpec(
                num_scalar_prefetch=0, grid=(c_tiles, b_tiles),
                in_specs=[
                    pl.BlockSpec((tm, D), lambda j, i: (i, 0)),
                    pl.BlockSpec((D, tn), lambda j, i: (0, j)),
                ],
                out_specs=pl.BlockSpec((tm, tn), lambda j, i: (i, j)),
            )
            semantics = ("parallel", "parallel")
        out = pl.pallas_call(
            _eval_kernel,
            out_shape=out_shape,
            grid_spec=grid_spec,
            compiler_params=pltpu.CompilerParams(
                dimension_semantics=semantics, vmem_limit_bytes=vmem_limit),
            cost_estimate=cost,
        )(emb_p, w_p)

    return out[:B, :C]


# ----------------------------------------------------------------------------
# Reference (pure JAX) and init
# ----------------------------------------------------------------------------
def _reference_train(embeddings, weight, labels, scale, margin):
    emb_n = embeddings / (jnp.sqrt(jnp.sum(embeddings ** 2, axis=1, keepdims=True)) + 1e-8)
    w_n = weight / (jnp.sqrt(jnp.sum(weight ** 2, axis=0, keepdims=True)) + 1e-8)
    cos_theta = jnp.matmul(emb_n, w_n, precision=jax.lax.Precision.HIGHEST)
    phi = cos_theta - margin
    onehot = jax.nn.one_hot(labels, weight.shape[1], dtype=jnp.bool_)
    return scale * jnp.where(onehot, phi, cos_theta)


def init_weight(key, input_dim, num_classes):
    # nn.init.kaiming_uniform_ (a=0, fan_in mode, leaky_relu):
    # for a 2-D tensor (input_dim, num_classes), fan_in = num_classes.
    gain = math.sqrt(2.0)
    bound = gain * math.sqrt(3.0 / num_classes)
    return jax.random.uniform(key, (input_dim, num_classes),
                              minval=-bound, maxval=bound, dtype=jnp.float32)


if __name__ == "__main__":
    key = jax.random.PRNGKey(0)
    k_emb, k_w, k_lab, k_emb2, k_w2, k_lab2 = jax.random.split(key, 6)

    # --- small shapes matching the module (B=8, D=32, C=16), default bf16 path -
    batch, input_dim, num_classes = 8, 32, 16
    embeddings = jax.random.normal(k_emb, (batch, input_dim), dtype=jnp.float32)
    weight = init_weight(k_w, input_dim, num_classes)
    labels = jax.random.randint(k_lab, (batch,), 0, num_classes, dtype=jnp.int32)

    logits_train = additive_softmax_linear(embeddings, weight, labels,
                                           scale=30.0, margin=0.35, training=True)
    jax.block_until_ready(logits_train)
    assert logits_train.shape == (batch, num_classes)
    # loose sanity check for the bf16-input path (structural errors are >= 10.5)
    want_small = _reference_train(embeddings, weight, labels, 30.0, 0.35)
    assert jnp.allclose(logits_train, want_small, rtol=1e-1, atol=5e-1), (
        float(jnp.max(jnp.abs(logits_train - want_small))))

    logits_eval = additive_softmax_linear(embeddings, weight, None, training=False)
    jax.block_until_ready(logits_eval)
    assert logits_eval.shape == (batch, num_classes)

    # --- multi-C-tile structural checks (one-hot offsets, padding, both grid
    #     paths) with f32 blocks against a pure-JAX reference.  Tolerances only
    #     need to absorb MXU matmul-precision noise; any tiling/one-hot bug
    #     produces errors >= scale*margin = 10.5. ------------------------------
    B2, D2, C2 = 16, 64, 300
    emb2 = jax.random.normal(k_emb2, (B2, D2), dtype=jnp.float32)
    w2 = init_weight(k_w2, D2, C2)
    lab2 = jax.random.randint(k_lab2, (B2,), 0, C2, dtype=jnp.int32)
    want = _reference_train(emb2, w2, lab2, 30.0, 0.35)

    # resident-B (1-D grid over C tiles) path
    got1 = additive_softmax_linear(emb2, w2, lab2, scale=30.0, margin=0.35,
                                   training=True, tile_n=128, mxu_bf16=False)
    # tiled-B (2-D grid, C outer / B inner, weight-norm hoist) path
    got2 = additive_softmax_linear(emb2, w2, lab2, scale=30.0, margin=0.35,
                                   training=True, tile_m=8, tile_n=128,
                                   mxu_bf16=False, max_resident_b=0)
    jax.block_until_ready((got1, got2))
    assert jnp.allclose(got1, want, rtol=5e-2, atol=2.5e-1), (
        float(jnp.max(jnp.abs(got1 - want))))
    assert jnp.allclose(got2, want, rtol=5e-2, atol=2.5e-1), (
        float(jnp.max(jnp.abs(got2 - want))))

    print("KERNEL_OK")
</pallas_src>

<mosaic_0001>
module attributes {stable_mosaic.version = 11 : i64} {
  func.func @kernel(%arg0: i32, %arg1: memref<16x32xbf16, #tpu.memory_space<vmem>>, %arg2: memref<32x128xbf16, #tpu.memory_space<vmem>>, %arg3: memref<16x1xi32, #tpu.memory_space<vmem>>, %arg4: memref<16x128xf32, #tpu.memory_space<vmem>>) attributes {dimension_semantics = [#tpu.dimension_semantics<parallel>], iteration_bounds = array<i64: 1>, scalar_prefetch = 0 : i64, scratch_operands = 0 : i64, tpu.core_type = #tpu.core_type<tc>, window_params = [{pipeline_mode = #tpu.pipeline_mode<synchronous>, transform_indices = @transform_0, window_bounds = array<i64: 16, 32>}, {transform_indices = @transform_1, window_bounds = array<i64: 32, 128>}, {pipeline_mode = #tpu.pipeline_mode<synchronous>, transform_indices = @transform_2, window_bounds = array<i64: 16, 1>}, {transform_indices = @transform_3, window_bounds = array<i64: 16, 128>}]} {
    %c0 = arith.constant 0 : index
    %c0_0 = arith.constant 0 : index
    %0 = vector.load %arg2[%c0, %c0_0] : memref<32x128xbf16, #tpu.memory_space<vmem>>, vector<32x128xbf16>
    %1 = arith.extf %0 : vector<32x128xbf16> to vector<32x128xf32>
    %2 = arith.mulf %1, %1 : vector<32x128xf32>
    %cst = arith.constant dense<0.000000e+00> : vector<128xf32>
    %3 = vector.multi_reduction <add>, %2, %cst [0] : vector<32x128xf32> to vector<128xf32>
    %4 = vector.shape_cast %3 : vector<128xf32> to vector<1x128xf32>
    %cst_1 = arith.constant 1.000000e-16 : f32
    %5 = vector.broadcast %cst_1 : f32 to vector<1x128xf32>
    %6 = arith.addf %4, %5 : vector<1x128xf32>
    %7 = math.rsqrt %6 : vector<1x128xf32>
    %8 = vector.broadcast %7 : vector<1x128xf32> to vector<32x128xf32>
    %9 = arith.mulf %1, %8 : vector<32x128xf32>
    %10 = arith.truncf %9 : vector<32x128xf32> to vector<32x128xbf16>
    %c0_2 = arith.constant 0 : index
    %c0_3 = arith.constant 0 : index
    %11 = vector.load %arg1[%c0_2, %c0_3] : memref<16x32xbf16, #tpu.memory_space<vmem>>, vector<16x32xbf16>
    %12 = arith.extf %11 : vector<16x32xbf16> to vector<16x32xf32>
    %13 = arith.mulf %12, %12 : vector<16x32xf32>
    %cst_4 = arith.constant dense<0.000000e+00> : vector<16xf32>
    %14 = vector.multi_reduction <add>, %13, %cst_4 [1] : vector<16x32xf32> to vector<16xf32>
    %15 = vector.shape_cast %14 : vector<16xf32> to vector<16x1xf32>
    %cst_5 = arith.constant 1.000000e-16 : f32
    %16 = vector.broadcast %cst_5 : f32 to vector<16x1xf32>
    %17 = arith.addf %15, %16 : vector<16x1xf32>
    %18 = math.rsqrt %17 : vector<16x1xf32>
    %cst_6 = arith.constant 3.000000e+01 : f32
    %19 = vector.broadcast %cst_6 : f32 to vector<16x1xf32>
    %20 = arith.mulf %19, %18 : vector<16x1xf32>
    %21 = vector.broadcast %20 : vector<16x1xf32> to vector<16x32xf32>
    %22 = arith.mulf %12, %21 : vector<16x32xf32>
    %23 = arith.truncf %22 : vector<16x32xf32> to vector<16x32xbf16>
    %cst_7 = arith.constant dense<0.000000e+00> : vector<16x128xf32>
    %24 = tpu.matmul %23, %10, %cst_7 {dimension_numbers = #tpu.dot_dimension_numbers<[1], [0], [0], [1], [0, 0, 1, 1], [], []>} : vector<16x32xbf16>, vector<32x128xbf16>, vector<16x128xf32> -> vector<16x128xf32>
    %25 = tpu.iota {dimensions = array<i32: 1>} : vector<16x128xi32>
    %c0_8 = arith.constant 0 : index
    %c0_9 = arith.constant 0 : index
    %26 = vector.load %arg3[%c0_8, %c0_9] : memref<16x1xi32, #tpu.memory_space<vmem>>, vector<16x1xi32>
    %c128_i32 = arith.constant 128 : i32
    %27 = arith.muli %arg0, %c128_i32 : i32
    %28 = vector.broadcast %27 : i32 to vector<16x1xi32>
    %29 = arith.subi %26, %28 : vector<16x1xi32>
    %30 = vector.broadcast %29 : vector<16x1xi32> to vector<16x128xi32>
    %31 = arith.cmpi eq, %25, %30 : vector<16x128xi32>
    %cst_10 = arith.constant 1.050000e+01 : f32
    %32 = vector.broadcast %cst_10 : f32 to vector<16x128xf32>
    %33 = arith.subf %24, %32 : vector<16x128xf32>
    %34 = arith.select %31, %33, %24 : vector<16x128xi1>, vector<16x128xf32>
    %c0_11 = arith.constant 0 : index
    %c0_12 = arith.constant 0 : index
    %35 = vector.load %arg4[%c0_11, %c0_12] : memref<16x128xf32, #tpu.memory_space<vmem>>, vector<16x128xf32>
    tpu.vector_store %arg4[%c0_11, %c0_12], %34 {strides = array<i32>} : memref<16x128xf32, #tpu.memory_space<vmem>>, vector<16x128xf32>,
    return
  }
  func.func @transform_0(%arg0: i32) -> (i32, i32) {
    %c0_i32 = arith.constant 0 : i32
    %c0_i32_0 = arith.constant 0 : i32
    %c0_i32_1 = arith.constant 0 : i32
    return %c0_i32, %c0_i32_0 : i32, i32
  }
  func.func @transform_1(%arg0: i32) -> (i32, i32) {
    %c0_i32 = arith.constant 0 : i32
    %c0_i32_0 = arith.constant 0 : i32
    return %c0_i32, %arg0 : i32, i32
  }
  func.func @transform_2(%arg0: i32) -> (i32, i32) {
    %c0_i32 = arith.constant 0 : i32
    %c0_i32_0 = arith.constant 0 : i32
    %c0_i32_1 = arith.constant 0 : i32
    return %c0_i32, %c0_i32_0 : i32, i32
  }
  func.func @transform_3(%arg0: i32) -> (i32, i32) {
    %c0_i32 = arith.constant 0 : i32
    %c0_i32_0 = arith.constant 0 : i32
    return %c0_i32, %arg0 : i32, i32
  }
}

</mosaic_0001>

<llo_original>
// kernel: tpu_custom_call.1
$region0: #{tpu_custom_call.1}
  #allocation0 [shape = 'u32[]', space=smem, size = 0x4, offset = 0x4, fixed_abs, tag = 'smem constant byte address 0x4 - core index']
  #allocation1 [shape = 'u32[144,128]{1,0:T(1,128)}', space=vmem, size = 0x12000, scoped, tag = 'internal scratch']
  %s0 = inlined_call_operand.hbm [shape: bf16[16,32], index: 0, kind: input, shape index: {}]
  %s1 = inlined_call_operand.vmem [shape: bf16[32,128], index: 1, kind: input, shape index: {}]
  %s2 = inlined_call_operand.vmem [shape: s32[16,1], index: 2, kind: input, shape index: {}]
  %s3 = inlined_call_operand.hbm [shape: f32[16,128], index: 3, kind: output, shape index: {}]
  %s4 = sld [smem:[#allocation0]]
  $region26: #{tpu_custom_call.1} parent=0
    _
  %s6 = ssub.s32 1, %s4
  %s7 = scalar_select 0, %s6, %s4
  $region1: #{tpu_custom_call.1} parent=0
    #allocation2 [shape = 'u8[4096]{0}', space=vmem, size = 0x1000, scoped, tag = 'input window, operand 0, single buffered']
    #allocation3 [shape = 's32[1]{0}', space=sflag, size = 0x4, scoped, tag = 'scoped memory for tpu_custom_call.1']
    #allocation4 [shape = 's32[1]{0}', space=sflag, size = 0x4, scoped, tag = 'scoped memory for tpu_custom_call.1']
    #allocation5 [shape = 'u8[8192]{0}', space=vmem, size = 0x2000, scoped, tag = 'output window, operand 0, single buffered']
    %8 = vsyncpa [#allocation3], 0
    %9 = vsyncpa [#allocation4], 0
    // Predicated region
    $region2: #{tpu_custom_call.1} parent=1 // pred_check
      _
    $region3: #{tpu_custom_call.1} parent=1 // pred_check_branch
      %11 = sbr.rel (0) target = $region5
    $region4: #{tpu_custom_call.1} parent=1 // pred_region
      %s13 = ssub.s32 128, 128
      %14 = vsyncadd [#allocation3], %s13
      %s15 = sshll.u32 [#allocation2], 4
      %s16 = int_to_ptr.vmem [resolvable:$true] %s15
      %21 = dma.hbm_to_vmem [thread:$0]  %s0, 128, %s16, [#allocation3], 64, 64, 4
    $region5: #{tpu_custom_call.1} parent=1 // pred_fallthru
      _
    // Predicated region
    $region6: #{tpu_custom_call.1} parent=1 // pred_check
      _
    $region7: #{tpu_custom_call.1} parent=1 // pred_check_branch
      %23 = sbr.rel (0) target = $region9
    $region8: #{tpu_custom_call.1} parent=1 // pred_region
      _
    $region9: #{tpu_custom_call.1} parent=1 // pred_fallthru
      _
    // Predicated region
    $region10: #{tpu_custom_call.1} parent=1 // pred_check
      _
    $region11: #{tpu_custom_call.1} parent=1 // pred_check_branch
      %25 = sbr.rel (0) target = $region13
    $region12: #{tpu_custom_call.1} parent=1 // pred_region
      _
    $region13: #{tpu_custom_call.1} parent=1 // pred_fallthru
      _
    // Predicated region
    $region14: #{tpu_custom_call.1} parent=1 // pred_check
      _
    $region15: #{tpu_custom_call.1} parent=1 // pred_check_branch
      %27 = sbr.rel (0) target = $region17
    $region16: #{tpu_custom_call.1} parent=1 // pred_region
      %28 = dma.done [#allocation3], 128
    $region17: #{tpu_custom_call.1} parent=1 // pred_fallthru
      _
    %v30 = vld [vmem:[%s1] sm:$0xf]
    %v31 = vld [vmem:[%s1 + $0x4] sm:$0xf]
    %v32 = vld [vmem:[%s1 + $0x8] sm:$0xf]
    %v33 = vld [vmem:[%s1 + $0xc] sm:$0xf]
    %v34 = vunpack.c.l.bf16 %v30
    %v35 = vunpack.c.l.bf16 %v31
    %v36 = vunpack.c.l.bf16 %v32
    %v37 = vunpack.c.l.bf16 %v33
    %v38 = vmul.f32 %v34, %v34
    %v39 = vmul.f32 %v35, %v35
    %v40 = vmul.f32 %v36, %v36
    %v41 = vmul.f32 %v37, %v37
    %v42 = vadd.f32 %v38, %v39
    %v43 = vadd.f32 %v42, %v40
    %v44 = vadd.f32 %v43, %v41
    %v45 = vrot.slane %v44, 4
    %v46 = vadd.f32 %v44, %v45
    %v47 = vrot.slane %v46, 2
    %v48 = vadd.f32 %v46, %v47
    %v49 = vrot.slane %v48, 1
    %v50 = vadd.f32 %v48, %v49
    %v51 = vadd.f32 %v50, 1e-16
    %v52 = vrsqrt.pop %v51
    %v53 = vmul.f32 %v34, %v52
    %v54 = vmul.f32 %v35, %v52
    %v55 = vmul.f32 %v36, %v52
    %v56 = vmul.f32 %v37, %v52
    %v57 = vpack.c.bf16 %v54, %v53
    %v58 = vpack.c.bf16 %v56, %v55
    %v59 = vld [vmem:[#allocation2] sm:$0xf]
    %v60 = vld [vmem:[#allocation2 + $0x4] sm:$0xf]
    %v61 = vunpack.c.l.bf16 %v59
    %v62 = vunpack.c.l.bf16 %v60
    %v63 = vmul.f32 %v61, %v61
    %v64 = vmul.f32 %v62, %v62
    %vm65 = vcmask 261120
    %v66 = vsel %vm65, %v63, 0.0
    %67 = vadd.xlane.f32.xlu0 %v66
    %v68 = vpop.xlane.xlu0 %67
    %v69 = vsel %vm65, %v64, 0.0
    %70 = vadd.xlane.f32.xlu0 %v69
    %v71 = vpop.xlane.xlu0 %70
    %v72 = vadd.f32 %v68, 1e-16
    %v73 = vadd.f32 %v71, 1e-16
    %v74 = vrsqrt.pop %v72
    %v75 = vrsqrt.pop %v73
    %v76 = vmul.f32 %v74, 30.0
    %v77 = vmul.f32 %v75, 30.0
    %v78 = vmul.f32 %v61, %v76
    %v79 = vmul.f32 %v62, %v77
    %v80 = vpack.c.bf16 %v79, %v78
    %v82 = vsel %vm65, %v80, 0
    %84 = vmatprep.subr.bf16.mxu0 0
    %85 = vmatpush1.bf16.msra.mxu0 %v57
    %86 = vmatprep.subr.bf16.mxu0 0
    %87 = vmatpush1.bf16.msra.mxu0 %v58
    %88 = vmatprep.subr.bf16.mxu0 0
    %89 = vmatpush1.bf16.msra.mxu0 0
    %90 = vmatprep.subr.bf16.mxu0 0
    %91 = vmatpush1.bf16.msra.mxu0 0
    %92 = vmatprep.subr.bf16.mxu0 0
    %93 = vmatpush1.bf16.msra.mxu0 0
    %94 = vmatprep.subr.bf16.mxu0 0
    %95 = vmatpush1.bf16.msra.mxu0 0
    %96 = vmatprep.subr.bf16.mxu0 0
    %97 = vmatpush1.bf16.msra.mxu0 0
    %98 = vmatprep.subr.bf16.mxu0 0
    %99 = vmatpush1.bf16.msra.mxu0 0
    %100 = vmatprep.subr.bf16.mxu0 0
    %101 = vmatpush1.bf16.msra.mxu0 0
    %102 = vmatprep.subr.bf16.mxu0 0
    %103 = vmatpush1.bf16.msra.mxu0 0
    %104 = vmatprep.subr.bf16.mxu0 0
    %105 = vmatpush1.bf16.msra.mxu0 0
    %106 = vmatprep.subr.bf16.mxu0 0
    %107 = vmatpush1.bf16.msra.mxu0 0
    %108 = vmatprep.subr.bf16.mxu0 0
    %109 = vmatpush1.bf16.msra.mxu0 0
    %110 = vmatprep.subr.bf16.mxu0 0
    %111 = vmatpush1.bf16.msra.mxu0 0
    %112 = vmatprep.subr.bf16.mxu0 0
    %113 = vmatpush1.bf16.msra.mxu0 0
    %114 = vmatprep.subr.bf16.mxu0 0
    %115 = vmatpush1.bf16.msra.mxu0 0
    %116 = vmatprep.mubr.bf16.mxu0 0
    %117 = vmatmul.mubr.bf16.gmra.mrb[0].mxu0 %v82
    %v118 = vpop.f32.mrb[0].mxu0
    %v119 = vadd.f32 0.0, %v118
    %v120 = vpop.f32.mrb[0].mxu0
    %v121 = vpop.f32.mrb[0].mxu0
    %v122 = vadd.f32 0.0, %v121
    %v123 = vpop.f32.mrb[0].mxu0
    %124 = vdwg.mxu0
    %v125 = vlaneseq
    %v126 = vand.u32 %v125, 127
    %v127 = vld [vmem:[%s2] sm:$0xff]
    %v128 = vld [vmem:[%s2 + $0x8] sm:$0xff]
    %s129 = smul.u32 0, 128
    %v130 = vstv %s129
    %v131 = vsub.s32 %v127, %v130
    %v132 = vsub.s32 %v128, %v130
    %133 = vset.pattern.permute.xlu0 0
    %134 = vperm.xlu0 %133, %v131
    %v135 = vpop.permute.xlu0 %134
    %136 = vset.pattern.permute.xlu0 0
    %137 = vperm.xlu0 %136, %v132
    %v138 = vpop.permute.xlu0 %137
    %vm139 = vcmp.eq.s32.totalorder %v126, %v135
    %vm140 = vcmp.eq.s32.totalorder %v126, %v138
    %v141 = vsub.f32 %v119, 10.5
    %v142 = vsub.f32 %v122, 10.5
    %v143 = vsel %vm139, %v141, %v119
    %v144 = vsel %vm140, %v142, %v122
    %145 = vst [vmem:[#allocation5] sm:$0xff] %v143
    %146 = vst [vmem:[#allocation5 + $0x8] sm:$0xff] %v144
    // Predicated region
    $region18: #{tpu_custom_call.1} parent=1 // pred_check
      _
    $region19: #{tpu_custom_call.1} parent=1 // pred_check_branch
      %148 = sbr.rel (0) target = $region21
    $region20: #{tpu_custom_call.1} parent=1 // pred_region
      %s150 = ssub.s32 256, 256
      %151 = vsyncadd [#allocation4], %s150
      %s152 = sshll.u32 [#allocation5], 4
      %s153 = int_to_ptr.vmem [resolvable:$true] %s152
      %158 = dma.vmem_to_hbm [thread:$0]  %s153, 256, %s3, [#allocation4], 128, 128, 8
    $region21: #{tpu_custom_call.1} parent=1 // pred_fallthru
      _
    // Predicated region
    $region22: #{tpu_custom_call.1} parent=1 // pred_check
      _
    $region23: #{tpu_custom_call.1} parent=1 // pred_check_branch
      %160 = sbr.rel (0) target = $region25
    $region24: #{tpu_custom_call.1} parent=1 // pred_region
      %161 = dma.done [#allocation4], 256
    $region25: #{tpu_custom_call.1} parent=1 // pred_fallthru
      _
    %162 = vsyncpa [#allocation3], 1
    %163 = vsyncpa [#allocation4], 1

</llo_original>
